<compile_context>
chip_gen: v5e
topology: v5e:2x2
jax: 0.10.0
libtpu: 0.0.40
codegen_flags: <defaults>
</compile_context>

<pallas_src>
import jax
import jax.numpy as jnp
from jax.experimental import pallas as pl
from jax.experimental.pallas import tpu as pltpu


def lstm_kernel(x_ref, h0_ref, c0_ref, w_ih_ref, w_hh_ref, b_ref,
                out_ref, hn_ref, cn_ref):
    """Full LSTM recurrence in one kernel invocation (grid=()).

    x_ref      : (seq_len,)  f32 in SMEM  -- scalar per-step reads
    h0_ref/c0_ref : (1, 1)   f32 in VMEM
    w_ih_ref   : (1, 4)      f32 in VMEM  -- gate order [i, f, o, g]
    w_hh_ref   : (1, 4)      f32 in VMEM  -- gate order [i, f, o, g]
    b_ref      : (1, 4)      f32 in VMEM  -- (b_ih + b_hh), same gate order
    out_ref    : (1, seq_len) f32         -- lane-dense hidden states
    hn_ref/cn_ref : (1, 1)   f32
    """
    seq_len = out_ref.shape[1]
    hidden = h0_ref.shape[1]          # == 1 for this module

    # Hoist weights once; they live in vregs across the whole unrolled loop.
    w_ih = w_ih_ref[...]              # (1, 4H)
    w_hh = w_hh_ref[...]              # (1, 4H)
    b = b_ref[...]                    # (1, 4H)

    h = h0_ref[...]                   # (1, H)
    c = c0_ref[...]                   # (1, H)

    # Lane-dense output accumulator, filled via arithmetic one-hot masks
    # (pure VPU), stored once at the end.
    lane_ids = jax.lax.broadcasted_iota(jnp.int32, (1, seq_len), dimension=1)
    out_acc = jnp.zeros((1, seq_len), jnp.float32)

    # seq_len is static -> fully unrolled recurrence.
    for t in range(seq_len):
        x_t = x_ref[t]                                    # scalar (SMEM read)
        # I = H = 1: gate pre-activations are broadcast multiplies (no MXU).
        gates = x_t * w_ih + h * w_hh + b                 # (1, 4H)
        # Gate order is [i, f, o, g]: one sigmoid over 3H lanes, one tanh.
        sig = jax.nn.sigmoid(gates[:, 0:3 * hidden])      # (1, 3H)
        g_g = jnp.tanh(gates[:, 3 * hidden:4 * hidden])   # (1, H)
        i_g = sig[:, 0 * hidden:1 * hidden]
        f_g = sig[:, 1 * hidden:2 * hidden]
        o_g = sig[:, 2 * hidden:3 * hidden]
        c = f_g * c + i_g * g_g
        h = o_g * jnp.tanh(c)
        # Stage h_t into lane t of the accumulator (VPU mask-add, no store).
        m_t = (lane_ids == t).astype(jnp.float32)         # (1, seq_len)
        out_acc = out_acc + m_t * h                       # h broadcasts (H=1)

    # Single dense store instead of seq_len masked per-step stores.
    out_ref[...] = out_acc
    hn_ref[...] = h
    cn_ref[...] = c


def lstm_forward(x, h0, c0, w_ih, w_hh, b_ih, b_hh):
    """Wrapper matching LSTMNet.forward: returns (out, (hn, cn))."""
    seq_len, input_size = x.shape
    num_layers, hidden = h0.shape
    # Kernel is specialized to the module spec (single-layer, scalar I/H).
    assert num_layers == 1, "kernel supports num_layers == 1 only"
    assert hidden == 1, "kernel supports hidden (output_size) == 1 only"
    assert input_size == 1, "kernel supports input_size == 1 only"

    f32 = jnp.float32
    # Gate-column reorder: PyTorch packs [i, f, g, o]; kernel wants [i, f, o, g]
    # so the three sigmoid gates are contiguous.
    idx = jnp.concatenate([
        jnp.arange(0 * hidden, 1 * hidden),   # i
        jnp.arange(1 * hidden, 2 * hidden),   # f
        jnp.arange(3 * hidden, 4 * hidden),   # o
        jnp.arange(2 * hidden, 3 * hidden),   # g
    ])
    w_ih_row = w_ih.astype(f32)[idx].T.reshape(1, 4 * hidden)      # (1, 4H)
    w_hh_row = w_hh.astype(f32)[idx].T.reshape(1, 4 * hidden)      # (1, 4H)
    b_row = (b_ih + b_hh).astype(f32)[idx].reshape(1, 4 * hidden)  # (1, 4H)
    x_flat = x.astype(f32).reshape(seq_len)                        # (S,)

    out_row, hn, cn = pl.pallas_call(
        lstm_kernel,
        out_shape=(
            jax.ShapeDtypeStruct((1, seq_len), f32),            # lane-dense out
            jax.ShapeDtypeStruct((num_layers, hidden), f32),    # hn
            jax.ShapeDtypeStruct((num_layers, hidden), f32),    # cn
        ),
        in_specs=[
            pl.BlockSpec(memory_space=pltpu.MemorySpace.SMEM),  # x (scalar reads)
            pl.BlockSpec(memory_space=pltpu.MemorySpace.VMEM),  # h0
            pl.BlockSpec(memory_space=pltpu.MemorySpace.VMEM),  # c0
            pl.BlockSpec(memory_space=pltpu.MemorySpace.VMEM),  # w_ih row
            pl.BlockSpec(memory_space=pltpu.MemorySpace.VMEM),  # w_hh row
            pl.BlockSpec(memory_space=pltpu.MemorySpace.VMEM),  # bias row
        ],
        out_specs=(
            pl.BlockSpec(memory_space=pltpu.MemorySpace.VMEM),
            pl.BlockSpec(memory_space=pltpu.MemorySpace.VMEM),
            pl.BlockSpec(memory_space=pltpu.MemorySpace.VMEM),
        ),
    )(x_flat, h0.astype(f32), c0.astype(f32), w_ih_row, w_hh_row, b_row)

    # Layout glue only (hidden == 1): lane-dense (1, S) -> time-major (S, 1).
    out = out_row.reshape(seq_len, hidden)
    return out, (hn, cn)


def lstm_reference(x, h0, c0, w_ih, w_hh, b_ih, b_hh):
    """Pure-JAX reference (same math as torch.nn.LSTM, unbatched)."""
    hidden = h0.shape[1]

    def step(carry, x_t):
        h, c = carry
        gates = x_t @ w_ih.T + h @ w_hh.T + b_ih + b_hh
        i_g = jax.nn.sigmoid(gates[0 * hidden:1 * hidden])
        f_g = jax.nn.sigmoid(gates[1 * hidden:2 * hidden])
        g_g = jnp.tanh(gates[2 * hidden:3 * hidden])
        o_g = jax.nn.sigmoid(gates[3 * hidden:4 * hidden])
        c_new = f_g * c + i_g * g_g
        h_new = o_g * jnp.tanh(c_new)
        return (h_new, c_new), h_new

    (h_fin, c_fin), outs = jax.lax.scan(step, (h0[0], c0[0]), x)
    return outs, (h_fin[None, :], c_fin[None, :])


if __name__ == "__main__":
    input_size = 1
    output_size = 1          # == hidden size of the LSTM
    num_layers = 1
    seq_len = 8

    key = jax.random.PRNGKey(0)
    kx, kw1, kw2, kb1, kb2 = jax.random.split(key, 5)

    # Deterministic parameter init mirroring torch.nn.LSTM's U(-1/sqrt(H), 1/sqrt(H)).
    bound = 1.0 / jnp.sqrt(jnp.float32(output_size))
    w_ih = jax.random.uniform(kw1, (4 * output_size, input_size),
                              jnp.float32, -bound, bound)
    w_hh = jax.random.uniform(kw2, (4 * output_size, output_size),
                              jnp.float32, -bound, bound)
    b_ih = jax.random.uniform(kb1, (4 * output_size,), jnp.float32, -bound, bound)
    b_hh = jax.random.uniform(kb2, (4 * output_size,), jnp.float32, -bound, bound)

    # Input: unbatched time-major sequence (seq_len, input_size).
    x = jax.random.normal(kx, (seq_len, input_size), jnp.float32)

    # h0/c0 default to zeros(num_layers, output_size), as in the module.
    h0 = jnp.zeros((num_layers, output_size), jnp.float32)
    c0 = jnp.zeros((num_layers, output_size), jnp.float32)

    out, (hn, cn) = lstm_forward(x, h0, c0, w_ih, w_hh, b_ih, b_hh)
    jax.block_until_ready((out, hn, cn))

    # Sanity check against a pure-JAX reference (original PyTorch gate order).
    out_ref, (hn_ref, cn_ref) = lstm_reference(x, h0, c0, w_ih, w_hh, b_ih, b_hh)
    assert jnp.allclose(out, out_ref, atol=1e-5), "out mismatch"
    assert jnp.allclose(hn, hn_ref, atol=1e-5), "hn mismatch"
    assert jnp.allclose(cn, cn_ref, atol=1e-5), "cn mismatch"

    print("KERNEL_OK")
</pallas_src>

<mosaic_0001>
module attributes {stable_mosaic.version = 11 : i64} {
  func.func @lstm_kernel(%arg0: memref<8xf32, #tpu.memory_space<smem>>, %arg1: memref<1x1xf32, #tpu.memory_space<vmem>>, %arg2: memref<1x1xf32, #tpu.memory_space<vmem>>, %arg3: memref<1x4xf32, #tpu.memory_space<vmem>>, %arg4: memref<1x4xf32, #tpu.memory_space<vmem>>, %arg5: memref<1x4xf32, #tpu.memory_space<vmem>>, %arg6: memref<1x8xf32, #tpu.memory_space<vmem>>, %arg7: memref<1x1xf32, #tpu.memory_space<vmem>>, %arg8: memref<1x1xf32, #tpu.memory_space<vmem>>) attributes {dimension_semantics = [], scalar_prefetch = 0 : i64, scratch_operands = 0 : i64, tpu.core_type = #tpu.core_type<tc>} {
    %c0 = arith.constant 0 : index
    %c0_0 = arith.constant 0 : index
    %0 = vector.load %arg3[%c0, %c0_0] : memref<1x4xf32, #tpu.memory_space<vmem>>, vector<1x4xf32>
    %c0_1 = arith.constant 0 : index
    %c0_2 = arith.constant 0 : index
    %1 = vector.load %arg4[%c0_1, %c0_2] : memref<1x4xf32, #tpu.memory_space<vmem>>, vector<1x4xf32>
    %c0_3 = arith.constant 0 : index
    %c0_4 = arith.constant 0 : index
    %2 = vector.load %arg5[%c0_3, %c0_4] : memref<1x4xf32, #tpu.memory_space<vmem>>, vector<1x4xf32>
    %c0_5 = arith.constant 0 : index
    %c0_6 = arith.constant 0 : index
    %3 = vector.load %arg1[%c0_5, %c0_6] : memref<1x1xf32, #tpu.memory_space<vmem>>, vector<1x1xf32>
    %c0_7 = arith.constant 0 : index
    %c0_8 = arith.constant 0 : index
    %4 = vector.load %arg2[%c0_7, %c0_8] : memref<1x1xf32, #tpu.memory_space<vmem>>, vector<1x1xf32>
    %5 = tpu.iota {dimensions = array<i32: 1>} : vector<1x8xi32>
    %cst = arith.constant 0.000000e+00 : f32
    %6 = vector.broadcast %cst : f32 to vector<1x8xf32>
    %c0_9 = arith.constant 0 : index
    %7 = memref.load %arg0[%c0_9] : memref<8xf32, #tpu.memory_space<smem>>
    %8 = vector.broadcast %7 : f32 to vector<1x4xf32>
    %9 = arith.mulf %8, %0 : vector<1x4xf32>
    %10 = vector.broadcast %3 : vector<1x1xf32> to vector<1x4xf32>
    %11 = arith.mulf %10, %1 : vector<1x4xf32>
    %12 = arith.addf %9, %11 : vector<1x4xf32>
    %13 = arith.addf %12, %2 : vector<1x4xf32>
    %14 = vector.extract_strided_slice %13 {offsets = [0, 0], sizes = [1, 3], strides = [1, 1]} : vector<1x4xf32> to vector<1x3xf32>
    %15 = arith.negf %14 : vector<1x3xf32>
    %16 = math.exp %15 : vector<1x3xf32>
    %cst_10 = arith.constant 1.000000e+00 : f32
    %17 = vector.broadcast %cst_10 : f32 to vector<1x3xf32>
    %18 = arith.addf %17, %16 : vector<1x3xf32>
    %19 = arith.divf %17, %18 : vector<1x3xf32>
    %20 = vector.extract_strided_slice %13 {offsets = [0, 3], sizes = [1, 1], strides = [1, 1]} : vector<1x4xf32> to vector<1x1xf32>
    %21 = math.tanh %20 : vector<1x1xf32>
    %22 = vector.extract_strided_slice %19 {offsets = [0, 0], sizes = [1, 1], strides = [1, 1]} : vector<1x3xf32> to vector<1x1xf32>
    %23 = vector.extract_strided_slice %19 {offsets = [0, 1], sizes = [1, 1], strides = [1, 1]} : vector<1x3xf32> to vector<1x1xf32>
    %24 = vector.extract_strided_slice %19 {offsets = [0, 2], sizes = [1, 1], strides = [1, 1]} : vector<1x3xf32> to vector<1x1xf32>
    %25 = arith.mulf %23, %4 : vector<1x1xf32>
    %26 = arith.mulf %22, %21 : vector<1x1xf32>
    %27 = arith.addf %25, %26 : vector<1x1xf32>
    %28 = math.tanh %27 : vector<1x1xf32>
    %29 = arith.mulf %24, %28 : vector<1x1xf32>
    %c0_i32 = arith.constant 0 : i32
    %30 = vector.broadcast %c0_i32 : i32 to vector<1x8xi32>
    %31 = arith.cmpi eq, %5, %30 : vector<1x8xi32>
    %32 = arith.extui %31 : vector<1x8xi1> to vector<1x8xi32>
    %33 = arith.sitofp %32 : vector<1x8xi32> to vector<1x8xf32>
    %34 = vector.broadcast %29 : vector<1x1xf32> to vector<1x8xf32>
    %35 = arith.mulf %33, %34 : vector<1x8xf32>
    %36 = arith.addf %6, %35 : vector<1x8xf32>
    %c1 = arith.constant 1 : index
    %37 = memref.load %arg0[%c1] : memref<8xf32, #tpu.memory_space<smem>>
    %38 = vector.broadcast %37 : f32 to vector<1x4xf32>
    %39 = arith.mulf %38, %0 : vector<1x4xf32>
    %40 = vector.broadcast %29 : vector<1x1xf32> to vector<1x4xf32>
    %41 = arith.mulf %40, %1 : vector<1x4xf32>
    %42 = arith.addf %39, %41 : vector<1x4xf32>
    %43 = arith.addf %42, %2 : vector<1x4xf32>
    %44 = vector.extract_strided_slice %43 {offsets = [0, 0], sizes = [1, 3], strides = [1, 1]} : vector<1x4xf32> to vector<1x3xf32>
    %45 = arith.negf %44 : vector<1x3xf32>
    %46 = math.exp %45 : vector<1x3xf32>
    %cst_11 = arith.constant 1.000000e+00 : f32
    %47 = vector.broadcast %cst_11 : f32 to vector<1x3xf32>
    %48 = arith.addf %47, %46 : vector<1x3xf32>
    %49 = arith.divf %47, %48 : vector<1x3xf32>
    %50 = vector.extract_strided_slice %43 {offsets = [0, 3], sizes = [1, 1], strides = [1, 1]} : vector<1x4xf32> to vector<1x1xf32>
    %51 = math.tanh %50 : vector<1x1xf32>
    %52 = vector.extract_strided_slice %49 {offsets = [0, 0], sizes = [1, 1], strides = [1, 1]} : vector<1x3xf32> to vector<1x1xf32>
    %53 = vector.extract_strided_slice %49 {offsets = [0, 1], sizes = [1, 1], strides = [1, 1]} : vector<1x3xf32> to vector<1x1xf32>
    %54 = vector.extract_strided_slice %49 {offsets = [0, 2], sizes = [1, 1], strides = [1, 1]} : vector<1x3xf32> to vector<1x1xf32>
    %55 = arith.mulf %53, %27 : vector<1x1xf32>
    %56 = arith.mulf %52, %51 : vector<1x1xf32>
    %57 = arith.addf %55, %56 : vector<1x1xf32>
    %58 = math.tanh %57 : vector<1x1xf32>
    %59 = arith.mulf %54, %58 : vector<1x1xf32>
    %c1_i32 = arith.constant 1 : i32
    %60 = vector.broadcast %c1_i32 : i32 to vector<1x8xi32>
    %61 = arith.cmpi eq, %5, %60 : vector<1x8xi32>
    %62 = arith.extui %61 : vector<1x8xi1> to vector<1x8xi32>
    %63 = arith.sitofp %62 : vector<1x8xi32> to vector<1x8xf32>
    %64 = vector.broadcast %59 : vector<1x1xf32> to vector<1x8xf32>
    %65 = arith.mulf %63, %64 : vector<1x8xf32>
    %66 = arith.addf %36, %65 : vector<1x8xf32>
    %c2 = arith.constant 2 : index
    %67 = memref.load %arg0[%c2] : memref<8xf32, #tpu.memory_space<smem>>
    %68 = vector.broadcast %67 : f32 to vector<1x4xf32>
    %69 = arith.mulf %68, %0 : vector<1x4xf32>
    %70 = vector.broadcast %59 : vector<1x1xf32> to vector<1x4xf32>
    %71 = arith.mulf %70, %1 : vector<1x4xf32>
    %72 = arith.addf %69, %71 : vector<1x4xf32>
    %73 = arith.addf %72, %2 : vector<1x4xf32>
    %74 = vector.extract_strided_slice %73 {offsets = [0, 0], sizes = [1, 3], strides = [1, 1]} : vector<1x4xf32> to vector<1x3xf32>
    %75 = arith.negf %74 : vector<1x3xf32>
    %76 = math.exp %75 : vector<1x3xf32>
    %cst_12 = arith.constant 1.000000e+00 : f32
    %77 = vector.broadcast %cst_12 : f32 to vector<1x3xf32>
    %78 = arith.addf %77, %76 : vector<1x3xf32>
    %79 = arith.divf %77, %78 : vector<1x3xf32>
    %80 = vector.extract_strided_slice %73 {offsets = [0, 3], sizes = [1, 1], strides = [1, 1]} : vector<1x4xf32> to vector<1x1xf32>
    %81 = math.tanh %80 : vector<1x1xf32>
    %82 = vector.extract_strided_slice %79 {offsets = [0, 0], sizes = [1, 1], strides = [1, 1]} : vector<1x3xf32> to vector<1x1xf32>
    %83 = vector.extract_strided_slice %79 {offsets = [0, 1], sizes = [1, 1], strides = [1, 1]} : vector<1x3xf32> to vector<1x1xf32>
    %84 = vector.extract_strided_slice %79 {offsets = [0, 2], sizes = [1, 1], strides = [1, 1]} : vector<1x3xf32> to vector<1x1xf32>
    %85 = arith.mulf %83, %57 : vector<1x1xf32>
    %86 = arith.mulf %82, %81 : vector<1x1xf32>
    %87 = arith.addf %85, %86 : vector<1x1xf32>
    %88 = math.tanh %87 : vector<1x1xf32>
    %89 = arith.mulf %84, %88 : vector<1x1xf32>
    %c2_i32 = arith.constant 2 : i32
    %90 = vector.broadcast %c2_i32 : i32 to vector<1x8xi32>
    %91 = arith.cmpi eq, %5, %90 : vector<1x8xi32>
    %92 = arith.extui %91 : vector<1x8xi1> to vector<1x8xi32>
    %93 = arith.sitofp %92 : vector<1x8xi32> to vector<1x8xf32>
    %94 = vector.broadcast %89 : vector<1x1xf32> to vector<1x8xf32>
    %95 = arith.mulf %93, %94 : vector<1x8xf32>
    %96 = arith.addf %66, %95 : vector<1x8xf32>
    %c3 = arith.constant 3 : index
    %97 = memref.load %arg0[%c3] : memref<8xf32, #tpu.memory_space<smem>>
    %98 = vector.broadcast %97 : f32 to vector<1x4xf32>
    %99 = arith.mulf %98, %0 : vector<1x4xf32>
    %100 = vector.broadcast %89 : vector<1x1xf32> to vector<1x4xf32>
    %101 = arith.mulf %100, %1 : vector<1x4xf32>
    %102 = arith.addf %99, %101 : vector<1x4xf32>
    %103 = arith.addf %102, %2 : vector<1x4xf32>
    %104 = vector.extract_strided_slice %103 {offsets = [0, 0], sizes = [1, 3], strides = [1, 1]} : vector<1x4xf32> to vector<1x3xf32>
    %105 = arith.negf %104 : vector<1x3xf32>
    %106 = math.exp %105 : vector<1x3xf32>
    %cst_13 = arith.constant 1.000000e+00 : f32
    %107 = vector.broadcast %cst_13 : f32 to vector<1x3xf32>
    %108 = arith.addf %107, %106 : vector<1x3xf32>
    %109 = arith.divf %107, %108 : vector<1x3xf32>
    %110 = vector.extract_strided_slice %103 {offsets = [0, 3], sizes = [1, 1], strides = [1, 1]} : vector<1x4xf32> to vector<1x1xf32>
    %111 = math.tanh %110 : vector<1x1xf32>
    %112 = vector.extract_strided_slice %109 {offsets = [0, 0], sizes = [1, 1], strides = [1, 1]} : vector<1x3xf32> to vector<1x1xf32>
    %113 = vector.extract_strided_slice %109 {offsets = [0, 1], sizes = [1, 1], strides = [1, 1]} : vector<1x3xf32> to vector<1x1xf32>
    %114 = vector.extract_strided_slice %109 {offsets = [0, 2], sizes = [1, 1], strides = [1, 1]} : vector<1x3xf32> to vector<1x1xf32>
    %115 = arith.mulf %113, %87 : vector<1x1xf32>
    %116 = arith.mulf %112, %111 : vector<1x1xf32>
    %117 = arith.addf %115, %116 : vector<1x1xf32>
    %118 = math.tanh %117 : vector<1x1xf32>
    %119 = arith.mulf %114, %118 : vector<1x1xf32>
    %c3_i32 = arith.constant 3 : i32
    %120 = vector.broadcast %c3_i32 : i32 to vector<1x8xi32>
    %121 = arith.cmpi eq, %5, %120 : vector<1x8xi32>
    %122 = arith.extui %121 : vector<1x8xi1> to vector<1x8xi32>
    %123 = arith.sitofp %122 : vector<1x8xi32> to vector<1x8xf32>
    %124 = vector.broadcast %119 : vector<1x1xf32> to vector<1x8xf32>
    %125 = arith.mulf %123, %124 : vector<1x8xf32>
    %126 = arith.addf %96, %125 : vector<1x8xf32>
    %c4 = arith.constant 4 : index
    %127 = memref.load %arg0[%c4] : memref<8xf32, #tpu.memory_space<smem>>
    %128 = vector.broadcast %127 : f32 to vector<1x4xf32>
    %129 = arith.mulf %128, %0 : vector<1x4xf32>
    %130 = vector.broadcast %119 : vector<1x1xf32> to vector<1x4xf32>
    %131 = arith.mulf %130, %1 : vector<1x4xf32>
    %132 = arith.addf %129, %131 : vector<1x4xf32>
    %133 = arith.addf %132, %2 : vector<1x4xf32>
    %134 = vector.extract_strided_slice %133 {offsets = [0, 0], sizes = [1, 3], strides = [1, 1]} : vector<1x4xf32> to vector<1x3xf32>
    %135 = arith.negf %134 : vector<1x3xf32>
    %136 = math.exp %135 : vector<1x3xf32>
    %cst_14 = arith.constant 1.000000e+00 : f32
    %137 = vector.broadcast %cst_14 : f32 to vector<1x3xf32>
    %138 = arith.addf %137, %136 : vector<1x3xf32>
    %139 = arith.divf %137, %138 : vector<1x3xf32>
    %140 = vector.extract_strided_slice %133 {offsets = [0, 3], sizes = [1, 1], strides = [1, 1]} : vector<1x4xf32> to vector<1x1xf32>
    %141 = math.tanh %140 : vector<1x1xf32>
    %142 = vector.extract_strided_slice %139 {offsets = [0, 0], sizes = [1, 1], strides = [1, 1]} : vector<1x3xf32> to vector<1x1xf32>
    %143 = vector.extract_strided_slice %139 {offsets = [0, 1], sizes = [1, 1], strides = [1, 1]} : vector<1x3xf32> to vector<1x1xf32>
    %144 = vector.extract_strided_slice %139 {offsets = [0, 2], sizes = [1, 1], strides = [1, 1]} : vector<1x3xf32> to vector<1x1xf32>
    %145 = arith.mulf %143, %117 : vector<1x1xf32>
    %146 = arith.mulf %142, %141 : vector<1x1xf32>
    %147 = arith.addf %145, %146 : vector<1x1xf32>
    %148 = math.tanh %147 : vector<1x1xf32>
    %149 = arith.mulf %144, %148 : vector<1x1xf32>
    %c4_i32 = arith.constant 4 : i32
    %150 = vector.broadcast %c4_i32 : i32 to vector<1x8xi32>
    %151 = arith.cmpi eq, %5, %150 : vector<1x8xi32>
    %152 = arith.extui %151 : vector<1x8xi1> to vector<1x8xi32>
    %153 = arith.sitofp %152 : vector<1x8xi32> to vector<1x8xf32>
    %154 = vector.broadcast %149 : vector<1x1xf32> to vector<1x8xf32>
    %155 = arith.mulf %153, %154 : vector<1x8xf32>
    %156 = arith.addf %126, %155 : vector<1x8xf32>
    %c5 = arith.constant 5 : index
    %157 = memref.load %arg0[%c5] : memref<8xf32, #tpu.memory_space<smem>>
    %158 = vector.broadcast %157 : f32 to vector<1x4xf32>
    %159 = arith.mulf %158, %0 : vector<1x4xf32>
    %160 = vector.broadcast %149 : vector<1x1xf32> to vector<1x4xf32>
    %161 = arith.mulf %160, %1 : vector<1x4xf32>
    %162 = arith.addf %159, %161 : vector<1x4xf32>
    %163 = arith.addf %162, %2 : vector<1x4xf32>
    %164 = vector.extract_strided_slice %163 {offsets = [0, 0], sizes = [1, 3], strides = [1, 1]} : vector<1x4xf32> to vector<1x3xf32>
    %165 = arith.negf %164 : vector<1x3xf32>
    %166 = math.exp %165 : vector<1x3xf32>
    %cst_15 = arith.constant 1.000000e+00 : f32
    %167 = vector.broadcast %cst_15 : f32 to vector<1x3xf32>
    %168 = arith.addf %167, %166 : vector<1x3xf32>
    %169 = arith.divf %167, %168 : vector<1x3xf32>
    %170 = vector.extract_strided_slice %163 {offsets = [0, 3], sizes = [1, 1], strides = [1, 1]} : vector<1x4xf32> to vector<1x1xf32>
    %171 = math.tanh %170 : vector<1x1xf32>
    %172 = vector.extract_strided_slice %169 {offsets = [0, 0], sizes = [1, 1], strides = [1, 1]} : vector<1x3xf32> to vector<1x1xf32>
    %173 = vector.extract_strided_slice %169 {offsets = [0, 1], sizes = [1, 1], strides = [1, 1]} : vector<1x3xf32> to vector<1x1xf32>
    %174 = vector.extract_strided_slice %169 {offsets = [0, 2], sizes = [1, 1], strides = [1, 1]} : vector<1x3xf32> to vector<1x1xf32>
    %175 = arith.mulf %173, %147 : vector<1x1xf32>
    %176 = arith.mulf %172, %171 : vector<1x1xf32>
    %177 = arith.addf %175, %176 : vector<1x1xf32>
    %178 = math.tanh %177 : vector<1x1xf32>
    %179 = arith.mulf %174, %178 : vector<1x1xf32>
    %c5_i32 = arith.constant 5 : i32
    %180 = vector.broadcast %c5_i32 : i32 to vector<1x8xi32>
    %181 = arith.cmpi eq, %5, %180 : vector<1x8xi32>
    %182 = arith.extui %181 : vector<1x8xi1> to vector<1x8xi32>
    %183 = arith.sitofp %182 : vector<1x8xi32> to vector<1x8xf32>
    %184 = vector.broadcast %179 : vector<1x1xf32> to vector<1x8xf32>
    %185 = arith.mulf %183, %184 : vector<1x8xf32>
    %186 = arith.addf %156, %185 : vector<1x8xf32>
    %c6 = arith.constant 6 : index
    %187 = memref.load %arg0[%c6] : memref<8xf32, #tpu.memory_space<smem>>
    %188 = vector.broadcast %187 : f32 to vector<1x4xf32>
    %189 = arith.mulf %188, %0 : vector<1x4xf32>
    %190 = vector.broadcast %179 : vector<1x1xf32> to vector<1x4xf32>
    %191 = arith.mulf %190, %1 : vector<1x4xf32>
    %192 = arith.addf %189, %191 : vector<1x4xf32>
    %193 = arith.addf %192, %2 : vector<1x4xf32>
    %194 = vector.extract_strided_slice %193 {offsets = [0, 0], sizes = [1, 3], strides = [1, 1]} : vector<1x4xf32> to vector<1x3xf32>
    %195 = arith.negf %194 : vector<1x3xf32>
    %196 = math.exp %195 : vector<1x3xf32>
    %cst_16 = arith.constant 1.000000e+00 : f32
    %197 = vector.broadcast %cst_16 : f32 to vector<1x3xf32>
    %198 = arith.addf %197, %196 : vector<1x3xf32>
    %199 = arith.divf %197, %198 : vector<1x3xf32>
    %200 = vector.extract_strided_slice %193 {offsets = [0, 3], sizes = [1, 1], strides = [1, 1]} : vector<1x4xf32> to vector<1x1xf32>
    %201 = math.tanh %200 : vector<1x1xf32>
    %202 = vector.extract_strided_slice %199 {offsets = [0, 0], sizes = [1, 1], strides = [1, 1]} : vector<1x3xf32> to vector<1x1xf32>
    %203 = vector.extract_strided_slice %199 {offsets = [0, 1], sizes = [1, 1], strides = [1, 1]} : vector<1x3xf32> to vector<1x1xf32>
    %204 = vector.extract_strided_slice %199 {offsets = [0, 2], sizes = [1, 1], strides = [1, 1]} : vector<1x3xf32> to vector<1x1xf32>
    %205 = arith.mulf %203, %177 : vector<1x1xf32>
    %206 = arith.mulf %202, %201 : vector<1x1xf32>
    %207 = arith.addf %205, %206 : vector<1x1xf32>
    %208 = math.tanh %207 : vector<1x1xf32>
    %209 = arith.mulf %204, %208 : vector<1x1xf32>
    %c6_i32 = arith.constant 6 : i32
    %210 = vector.broadcast %c6_i32 : i32 to vector<1x8xi32>
    %211 = arith.cmpi eq, %5, %210 : vector<1x8xi32>
    %212 = arith.extui %211 : vector<1x8xi1> to vector<1x8xi32>
    %213 = arith.sitofp %212 : vector<1x8xi32> to vector<1x8xf32>
    %214 = vector.broadcast %209 : vector<1x1xf32> to vector<1x8xf32>
    %215 = arith.mulf %213, %214 : vector<1x8xf32>
    %216 = arith.addf %186, %215 : vector<1x8xf32>
    %c7 = arith.constant 7 : index
    %217 = memref.load %arg0[%c7] : memref<8xf32, #tpu.memory_space<smem>>
    %218 = vector.broadcast %217 : f32 to vector<1x4xf32>
    %219 = arith.mulf %218, %0 : vector<1x4xf32>
    %220 = vector.broadcast %209 : vector<1x1xf32> to vector<1x4xf32>
    %221 = arith.mulf %220, %1 : vector<1x4xf32>
    %222 = arith.addf %219, %221 : vector<1x4xf32>
    %223 = arith.addf %222, %2 : vector<1x4xf32>
    %224 = vector.extract_strided_slice %223 {offsets = [0, 0], sizes = [1, 3], strides = [1, 1]} : vector<1x4xf32> to vector<1x3xf32>
    %225 = arith.negf %224 : vector<1x3xf32>
    %226 = math.exp %225 : vector<1x3xf32>
    %cst_17 = arith.constant 1.000000e+00 : f32
    %227 = vector.broadcast %cst_17 : f32 to vector<1x3xf32>
    %228 = arith.addf %227, %226 : vector<1x3xf32>
    %229 = arith.divf %227, %228 : vector<1x3xf32>
    %230 = vector.extract_strided_slice %223 {offsets = [0, 3], sizes = [1, 1], strides = [1, 1]} : vector<1x4xf32> to vector<1x1xf32>
    %231 = math.tanh %230 : vector<1x1xf32>
    %232 = vector.extract_strided_slice %229 {offsets = [0, 0], sizes = [1, 1], strides = [1, 1]} : vector<1x3xf32> to vector<1x1xf32>
    %233 = vector.extract_strided_slice %229 {offsets = [0, 1], sizes = [1, 1], strides = [1, 1]} : vector<1x3xf32> to vector<1x1xf32>
    %234 = vector.extract_strided_slice %229 {offsets = [0, 2], sizes = [1, 1], strides = [1, 1]} : vector<1x3xf32> to vector<1x1xf32>
    %235 = arith.mulf %233, %207 : vector<1x1xf32>
    %236 = arith.mulf %232, %231 : vector<1x1xf32>
    %237 = arith.addf %235, %236 : vector<1x1xf32>
    %238 = math.tanh %237 : vector<1x1xf32>
    %239 = arith.mulf %234, %238 : vector<1x1xf32>
    %c7_i32 = arith.constant 7 : i32
    %240 = vector.broadcast %c7_i32 : i32 to vector<1x8xi32>
    %241 = arith.cmpi eq, %5, %240 : vector<1x8xi32>
    %242 = arith.extui %241 : vector<1x8xi1> to vector<1x8xi32>
    %243 = arith.sitofp %242 : vector<1x8xi32> to vector<1x8xf32>
    %244 = vector.broadcast %239 : vector<1x1xf32> to vector<1x8xf32>
    %245 = arith.mulf %243, %244 : vector<1x8xf32>
    %246 = arith.addf %216, %245 : vector<1x8xf32>
    %c0_18 = arith.constant 0 : index
    %c0_19 = arith.constant 0 : index
    %247 = vector.load %arg6[%c0_18, %c0_19] : memref<1x8xf32, #tpu.memory_space<vmem>>, vector<1x8xf32>
    tpu.vector_store %arg6[%c0_18, %c0_19], %246 {strides = array<i32>} : memref<1x8xf32, #tpu.memory_space<vmem>>, vector<1x8xf32>,
    %c0_20 = arith.constant 0 : index
    %c0_21 = arith.constant 0 : index
    %248 = vector.load %arg7[%c0_20, %c0_21] : memref<1x1xf32, #tpu.memory_space<vmem>>, vector<1x1xf32>
    tpu.vector_store %arg7[%c0_20, %c0_21], %239 {strides = array<i32>} : memref<1x1xf32, #tpu.memory_space<vmem>>, vector<1x1xf32>,
    %c0_22 = arith.constant 0 : index
    %c0_23 = arith.constant 0 : index
    %249 = vector.load %arg8[%c0_22, %c0_23] : memref<1x1xf32, #tpu.memory_space<vmem>>, vector<1x1xf32>
    tpu.vector_store %arg8[%c0_22, %c0_23], %237 {strides = array<i32>} : memref<1x1xf32, #tpu.memory_space<vmem>>, vector<1x1xf32>,
    return
  }
}

</mosaic_0001>

<llo_original>
// kernel: tpu_custom_call.1
$region0: #{tpu_custom_call.1}
  #allocation0 [shape = 'u32[]', space=smem, size = 0x4, offset = 0x4, fixed_abs, tag = 'smem constant byte address 0x4 - core index']
  #allocation1 [shape = 'u32[72,128]{1,0:T(1,128)}', space=vmem, size = 0x9000, scoped, tag = 'internal scratch']
  #allocation2 [shape = 'f32[1,1]{1,0:T(1,128)S(1)}', space=vmem, size = 0x200, scoped, tag = 'scoped memory for tpu_custom_call.1']
  #allocation3 [shape = 'f32[1,1]{1,0:T(1,128)S(1)}', space=vmem, size = 0x200, scoped, tag = 'scoped memory for tpu_custom_call.1']
  %s0 = inlined_call_operand.vmem [shape: f32[8], index: 0, kind: input, shape index: {}]
  %s1 = inlined_call_operand.<no memory space> [shape: f32[1,1], index: 1, kind: input, shape index: {}]
  %s2 = inlined_call_operand.<no memory space> [shape: f32[1,1], index: 2, kind: input, shape index: {}]
  %s3 = inlined_call_operand.vmem [shape: f32[1,4], index: 3, kind: input, shape index: {}]
  %s4 = inlined_call_operand.vmem [shape: f32[1,4], index: 4, kind: input, shape index: {}]
  %s5 = inlined_call_operand.vmem [shape: f32[1,4], index: 5, kind: input, shape index: {}]
  %s6 = inlined_call_operand.hbm [shape: f32[1,8], index: 6, kind: output, shape index: {0}]
  %s7 = inlined_call_operand.hbm [shape: f32[1,1], index: 7, kind: output, shape index: {1}]
  %s8 = inlined_call_operand.hbm [shape: f32[1,1], index: 8, kind: output, shape index: {2}]
  %9 = xla_tuple %s6, %s7, %s8
  %s10 = sld [smem:[#allocation0]]
  $region54: #{tpu_custom_call.1} parent=0
    _
  %s12 = ssub.s32 1, %s10
  %s13 = scalar_select 0, %s12, %s10
  %v14 = vstv %s1
  %15 = vst [vmem:[#allocation2] sm:$0x1] %v14
  %v16 = vstv %s2
  %17 = vst [vmem:[#allocation3] sm:$0x1] %v16
  $region1: #{tpu_custom_call.1} parent=0
    #allocation4 [shape = 'u8[512]{0}', space=smem, size = 0x200, scoped, tag = 'input window, operand 0, single buffered']
    #allocation5 [shape = 's32[1]{0}', space=sflag, size = 0x4, scoped, tag = 'scoped memory for tpu_custom_call.1']
    #allocation6 [shape = 's32[1]{0}', space=sflag, size = 0x4, scoped, tag = 'scoped memory for tpu_custom_call.1']
    #allocation7 [shape = 'u8[512]{0}', space=vmem, size = 0x400, scoped, tag = 'output window, operand 0, single buffered']
    #allocation8 [shape = 'u8[512]{0}', space=vmem, size = 0x400, scoped, tag = 'output window, operand 1, single buffered']
    #allocation9 [shape = 's32[1]{0}', space=sflag, size = 0x4, scoped, tag = 'scoped memory for tpu_custom_call.1']
    #allocation10 [shape = 'u8[512]{0}', space=vmem, size = 0x400, scoped, tag = 'output window, operand 2, single buffered']
    %18 = vsyncpa [#allocation6], 0
    %19 = vsyncpa [#allocation5], 0
    %20 = vsyncpa [#allocation9], 0
    // Predicated region
    $region2: #{tpu_custom_call.1} parent=1 // pred_check
      _
    $region3: #{tpu_custom_call.1} parent=1 // pred_check_branch
      %22 = sbr.rel (0) target = $region5
    $region4: #{tpu_custom_call.1} parent=1 // pred_region
      %24 = vsyncadd [#allocation6], 0
      %s26 = sshll.u32 %s0, 4
      %s27 = int_to_ptr.vmem [resolvable:$true] %s26
      %29 = dma.vmem_to_smem %s27, 16, [#allocation4], [#allocation6]
    $region5: #{tpu_custom_call.1} parent=1 // pred_fallthru
      _
    // Predicated region
    $region6: #{tpu_custom_call.1} parent=1 // pred_check
      _
    $region7: #{tpu_custom_call.1} parent=1 // pred_check_branch
      %31 = sbr.rel (0) target = $region9
    $region8: #{tpu_custom_call.1} parent=1 // pred_region
      _
    $region9: #{tpu_custom_call.1} parent=1 // pred_fallthru
      _
    // Predicated region
    $region10: #{tpu_custom_call.1} parent=1 // pred_check
      _
    $region11: #{tpu_custom_call.1} parent=1 // pred_check_branch
      %33 = sbr.rel (0) target = $region13
    $region12: #{tpu_custom_call.1} parent=1 // pred_region
      _
    $region13: #{tpu_custom_call.1} parent=1 // pred_fallthru
      _
    // Predicated region
    $region14: #{tpu_custom_call.1} parent=1 // pred_check
      _
    $region15: #{tpu_custom_call.1} parent=1 // pred_check_branch
      %35 = sbr.rel (0) target = $region17
    $region16: #{tpu_custom_call.1} parent=1 // pred_region
      _
    $region17: #{tpu_custom_call.1} parent=1 // pred_fallthru
      _
    // Predicated region
    $region18: #{tpu_custom_call.1} parent=1 // pred_check
      _
    $region19: #{tpu_custom_call.1} parent=1 // pred_check_branch
      %37 = sbr.rel (0) target = $region21
    $region20: #{tpu_custom_call.1} parent=1 // pred_region
      _
    $region21: #{tpu_custom_call.1} parent=1 // pred_fallthru
      _
    // Predicated region
    $region22: #{tpu_custom_call.1} parent=1 // pred_check
      _
    $region23: #{tpu_custom_call.1} parent=1 // pred_check_branch
      %39 = sbr.rel (0) target = $region25
    $region24: #{tpu_custom_call.1} parent=1 // pred_region
      _
    $region25: #{tpu_custom_call.1} parent=1 // pred_fallthru
      _
    // Predicated region
    $region26: #{tpu_custom_call.1} parent=1 // pred_check
      _
    $region27: #{tpu_custom_call.1} parent=1 // pred_check_branch
      %41 = sbr.rel (0) target = $region29
    $region28: #{tpu_custom_call.1} parent=1 // pred_region
      %43 = dma.done [#allocation6], 16
    $region29: #{tpu_custom_call.1} parent=1 // pred_fallthru
      _
    %44 = sfence
    %v45 = vld [vmem:[%s3] sm:$0x1]
    %v46 = vld [vmem:[%s4] sm:$0x1]
    %v47 = vld [vmem:[%s5] sm:$0x1]
    %v48 = vld [vmem:[#allocation2] sm:$0x1]
    %v49 = vld [vmem:[#allocation3] sm:$0x1]
    %v50 = vlaneseq
    %v51 = vand.u32 %v50, 127
    %s52 = sld [smem:[#allocation4]]
    %v53 = vstv %s52
    %v54 = vmul.f32 %v53, %v45
    %56 = vset.pattern.permute.xlu0 0
    %57 = vperm.xlu0 %56, %v48
    %v58 = vpop.permute.xlu0 %57
    %v60 = vperm.slane %v58, 0
    %v61 = vmul.f32 %v60, %v46
    %v62 = vadd.f32 %v54, %v61
    %v63 = vadd.f32 %v62, %v47
    %v64 = vxor.u32 %v63, 2147483648
    %v65 = vmul.f32 %v64, 1.442695
    %v66 = vpow.pop %v65
    %v67 = vadd.f32 %v66, 1.0
    %v68 = vrcp.pop %v67
    %v69 = vmul.f32 %v67, %v68
    %v70 = vsub.f32 1.0, %v69
    %v71 = vmul.f32 %v68, %v70
    %v72 = vadd.f32 %v68, %v71
    %vm73 = vweird.f32 %v67
    %vm74 = vweird.f32 %v68
    %vm75 = vmor %vm73, %vm74
    %v76 = vsel %vm75, %v68, %v72
    %v77 = vand.u32 2147483647, %v67
    %vm78 = vcmp.eq.f32.partialorder %v77, 8.507059e+37
    %v79 = vand.u32 %v67, 2147483648
    %v80 = vor.u32 1.1754944e-38, %v79
    %v81 = vsel %vm78, %v80, %v76
    %v82 = vmul.f32 1.0, %v81
    %v83 = vtanh.pop %v63
    %85 = vrot.lane.b32.xlu0 %v49, 1
    %v86 = vpop.permute.xlu0 %85
    %v88 = vmul.f32 %v82, %v86
    %90 = vrot.lane.b32.xlu0 %v83, 125
    %v91 = vpop.permute.xlu0 %90
    %v93 = vmul.f32 %v82, %v91
    %95 = vrot.lane.b32.xlu0 %v93, 1
    %v96 = vpop.permute.xlu0 %95
    %v98 = vadd.f32 %v88, %v96
    %v99 = vtanh.pop %v98
    %101 = vrot.lane.b32.xlu0 %v99, 1
    %v102 = vpop.permute.xlu0 %101
    %v104 = vmul.f32 %v82, %v102
    %vm105 = vcmp.eq.s32.totalorder %v51, 0
    %v106 = vsel %vm105, 1, 0
    %v107 = vcvt.s32.f32 %v106
    %109 = vset.pattern.permute.xlu0 2
    %110 = vperm.xlu0 %109, %v104
    %v111 = vpop.permute.xlu0 %110
    %v113 = vperm.slane %v111, 0
    %v114 = vmul.f32 %v107, %v113
    %v115 = vadd.f32 %v114, 0.0
    %s116 = sld [smem:[#allocation4 + $0x1]]
    %v117 = vstv %s116
    %v118 = vmul.f32 %v117, %v45
    %v119 = vmul.f32 %v113, %v46
    %v120 = vadd.f32 %v118, %v119
    %v121 = vadd.f32 %v120, %v47
    %v122 = vxor.u32 %v121, 2147483648
    %v123 = vmul.f32 %v122, 1.442695
    %v124 = vpow.pop %v123
    %v125 = vadd.f32 %v124, 1.0
    %v126 = vrcp.pop %v125
    %v127 = vmul.f32 %v125, %v126
    %v128 = vsub.f32 1.0, %v127
    %v129 = vmul.f32 %v126, %v128
    %v130 = vadd.f32 %v126, %v129
    %vm131 = vweird.f32 %v125
    %vm132 = vweird.f32 %v126
    %vm133 = vmor %vm131, %vm132
    %v134 = vsel %vm133, %v126, %v130
    %v135 = vand.u32 2147483647, %v125
    %vm136 = vcmp.eq.f32.partialorder %v135, 8.507059e+37
    %v137 = vand.u32 %v125, 2147483648
    %v138 = vor.u32 1.1754944e-38, %v137
    %v139 = vsel %vm136, %v138, %v134
    %v140 = vmul.f32 1.0, %v139
    %v141 = vtanh.pop %v121
    %v142 = vmul.f32 %v140, %v98
    %144 = vrot.lane.b32.xlu0 %v141, 125
    %v145 = vpop.permute.xlu0 %144
    %v147 = vmul.f32 %v140, %v145
    %149 = vrot.lane.b32.xlu0 %v147, 1
    %v150 = vpop.permute.xlu0 %149
    %v152 = vadd.f32 %v142, %v150
    %v153 = vtanh.pop %v152
    %155 = vrot.lane.b32.xlu0 %v153, 1
    %v156 = vpop.permute.xlu0 %155
    %v158 = vmul.f32 %v140, %v156
    %vm159 = vcmp.eq.s32.totalorder %v51, 1
    %v160 = vsel %vm159, 1, 0
    %v161 = vcvt.s32.f32 %v160
    %163 = vset.pattern.permute.xlu0 2
    %164 = vperm.xlu0 %163, %v158
    %v165 = vpop.permute.xlu0 %164
    %v167 = vperm.slane %v165, 0
    %v168 = vmul.f32 %v161, %v167
    %v169 = vadd.f32 %v115, %v168
    %s170 = sld [smem:[#allocation4 + $0x2]]
    %v171 = vstv %s170
    %v172 = vmul.f32 %v171, %v45
    %v173 = vmul.f32 %v167, %v46
    %v174 = vadd.f32 %v172, %v173
    %v175 = vadd.f32 %v174, %v47
    %v176 = vxor.u32 %v175, 2147483648
    %v177 = vmul.f32 %v176, 1.442695
    %v178 = vpow.pop %v177
    %v179 = vadd.f32 %v178, 1.0
    %v180 = vrcp.pop %v179
    %v181 = vmul.f32 %v179, %v180
    %v182 = vsub.f32 1.0, %v181
    %v183 = vmul.f32 %v180, %v182
    %v184 = vadd.f32 %v180, %v183
    %vm185 = vweird.f32 %v179
    %vm186 = vweird.f32 %v180
    %vm187 = vmor %vm185, %vm186
    %v188 = vsel %vm187, %v180, %v184
    %v189 = vand.u32 2147483647, %v179
    %vm190 = vcmp.eq.f32.partialorder %v189, 8.507059e+37
    %v191 = vand.u32 %v179, 2147483648
    %v192 = vor.u32 1.1754944e-38, %v191
    %v193 = vsel %vm190, %v192, %v188
    %v194 = vmul.f32 1.0, %v193
    %v195 = vtanh.pop %v175
    %v196 = vmul.f32 %v194, %v152
    %198 = vrot.lane.b32.xlu0 %v195, 125
    %v199 = vpop.permute.xlu0 %198
    %v201 = vmul.f32 %v194, %v199
    %203 = vrot.lane.b32.xlu0 %v201, 1
    %v204 = vpop.permute.xlu0 %203
    %v206 = vadd.f32 %v196, %v204
    %v207 = vtanh.pop %v206
    %209 = vrot.lane.b32.xlu0 %v207, 1
    %v210 = vpop.permute.xlu0 %209
    %v212 = vmul.f32 %v194, %v210
    %vm213 = vcmp.eq.s32.totalorder %v51, 2
    %v214 = vsel %vm213, 1, 0
    %v215 = vcvt.s32.f32 %v214
    %217 = vset.pattern.permute.xlu0 2
    %218 = vperm.xlu0 %217, %v212
    %v219 = vpop.permute.xlu0 %218
    %v221 = vperm.slane %v219, 0
    %v222 = vmul.f32 %v215, %v221
    %v223 = vadd.f32 %v169, %v222
    %s224 = sld [smem:[#allocation4 + $0x3]]
    %v225 = vstv %s224
    %v226 = vmul.f32 %v225, %v45
    %v227 = vmul.f32 %v221, %v46
    %v228 = vadd.f32 %v226, %v227
    %v229 = vadd.f32 %v228, %v47
    %v230 = vxor.u32 %v229, 2147483648
    %v231 = vmul.f32 %v230, 1.442695
    %v232 = vpow.pop %v231
    %v233 = vadd.f32 %v232, 1.0
    %v234 = vrcp.pop %v233
    %v235 = vmul.f32 %v233, %v234
    %v236 = vsub.f32 1.0, %v235
    %v237 = vmul.f32 %v234, %v236
    %v238 = vadd.f32 %v234, %v237
    %vm239 = vweird.f32 %v233
    %vm240 = vweird.f32 %v234
    %vm241 = vmor %vm239, %vm240
    %v242 = vsel %vm241, %v234, %v238
    %v243 = vand.u32 2147483647, %v233
    %vm244 = vcmp.eq.f32.partialorder %v243, 8.507059e+37
    %v245 = vand.u32 %v233, 2147483648
    %v246 = vor.u32 1.1754944e-38, %v245
    %v247 = vsel %vm244, %v246, %v242
    %v248 = vmul.f32 1.0, %v247
    %v249 = vtanh.pop %v229
    %v250 = vmul.f32 %v248, %v206
    %252 = vrot.lane.b32.xlu0 %v249, 125
    %v253 = vpop.permute.xlu0 %252
    %v255 = vmul.f32 %v248, %v253
    %257 = vrot.lane.b32.xlu0 %v255, 1
    %v258 = vpop.permute.xlu0 %257
    %v260 = vadd.f32 %v250, %v258
    %v261 = vtanh.pop %v260
    %263 = vrot.lane.b32.xlu0 %v261, 1
    %v264 = vpop.permute.xlu0 %263
    %v266 = vmul.f32 %v248, %v264
    %vm267 = vcmp.eq.s32.totalorder %v51, 3
    %v268 = vsel %vm267, 1, 0
    %v269 = vcvt.s32.f32 %v268
    %271 = vset.pattern.permute.xlu0 2
    %272 = vperm.xlu0 %271, %v266
    %v273 = vpop.permute.xlu0 %272
    %v275 = vperm.slane %v273, 0
    %v276 = vmul.f32 %v269, %v275
    %v277 = vadd.f32 %v223, %v276
    %s278 = sld [smem:[#allocation4 + $0x4]]
    %v279 = vstv %s278
    %v280 = vmul.f32 %v279, %v45
    %v281 = vmul.f32 %v275, %v46
    %v282 = vadd.f32 %v280, %v281
    %v283 = vadd.f32 %v282, %v47
    %v284 = vxor.u32 %v283, 2147483648
    %v285 = vmul.f32 %v284, 1.442695
    %v286 = vpow.pop %v285
    %v287 = vadd.f32 %v286, 1.0
    %v288 = vrcp.pop %v287
    %v289 = vmul.f32 %v287, %v288
    %v290 = vsub.f32 1.0, %v289
    %v291 = vmul.f32 %v288, %v290
    %v292 = vadd.f32 %v288, %v291
    %vm293 = vweird.f32 %v287
    %vm294 = vweird.f32 %v288
    %vm295 = vmor %vm293, %vm294
    %v296 = vsel %vm295, %v288, %v292
    %v297 = vand.u32 2147483647, %v287
    %vm298 = vcmp.eq.f32.partialorder %v297, 8.507059e+37
    %v299 = vand.u32 %v287, 2147483648
    %v300 = vor.u32 1.1754944e-38, %v299
    %v301 = vsel %vm298, %v300, %v296
    %v302 = vmul.f32 1.0, %v301
    %v303 = vtanh.pop %v283
    %v304 = vmul.f32 %v302, %v260
    %306 = vrot.lane.b32.xlu0 %v303, 125
    %v307 = vpop.permute.xlu0 %306
    %v309 = vmul.f32 %v302, %v307
    %311 = vrot.lane.b32.xlu0 %v309, 1
    %v312 = vpop.permute.xlu0 %311
    %v314 = vadd.f32 %v304, %v312
    %v315 = vtanh.pop %v314
    %317 = vrot.lane.b32.xlu0 %v315, 1
    %v318 = vpop.permute.xlu0 %317
    %v320 = vmul.f32 %v302, %v318
    %vm321 = vcmp.eq.s32.totalorder %v51, 4
    %v322 = vsel %vm321, 1, 0
    %v323 = vcvt.s32.f32 %v322
    %325 = vset.pattern.permute.xlu0 2
    %326 = vperm.xlu0 %325, %v320
    %v327 = vpop.permute.xlu0 %326
    %v329 = vperm.slane %v327, 0
    %v330 = vmul.f32 %v323, %v329
    %v331 = vadd.f32 %v277, %v330
    %s332 = sld [smem:[#allocation4 + $0x5]]
    %v333 = vstv %s332
    %v334 = vmul.f32 %v333, %v45
    %v335 = vmul.f32 %v329, %v46
    %v336 = vadd.f32 %v334, %v335
    %v337 = vadd.f32 %v336, %v47
    %v338 = vxor.u32 %v337, 2147483648
    %v339 = vmul.f32 %v338, 1.442695
    %v340 = vpow.pop %v339
    %v341 = vadd.f32 %v340, 1.0
    %v342 = vrcp.pop %v341
    %v343 = vmul.f32 %v341, %v342
    %v344 = vsub.f32 1.0, %v343
    %v345 = vmul.f32 %v342, %v344
    %v346 = vadd.f32 %v342, %v345
    %vm347 = vweird.f32 %v341
    %vm348 = vweird.f32 %v342
    %vm349 = vmor %vm347, %vm348
    %v350 = vsel %vm349, %v342, %v346
    %v351 = vand.u32 2147483647, %v341
    %vm352 = vcmp.eq.f32.partialorder %v351, 8.507059e+37
    %v353 = vand.u32 %v341, 2147483648
    %v354 = vor.u32 1.1754944e-38, %v353
    %v355 = vsel %vm352, %v354, %v350
    %v356 = vmul.f32 1.0, %v355
    %v357 = vtanh.pop %v337
    %v358 = vmul.f32 %v356, %v314
    %360 = vrot.lane.b32.xlu0 %v357, 125
    %v361 = vpop.permute.xlu0 %360
    %v363 = vmul.f32 %v356, %v361
    %365 = vrot.lane.b32.xlu0 %v363, 1
    %v366 = vpop.permute.xlu0 %365
    %v368 = vadd.f32 %v358, %v366
    %v369 = vtanh.pop %v368
    %371 = vrot.lane.b32.xlu0 %v369, 1
    %v372 = vpop.permute.xlu0 %371
    %v374 = vmul.f32 %v356, %v372
    %vm375 = vcmp.eq.s32.totalorder %v51, 5
    %v376 = vsel %vm375, 1, 0
    %v377 = vcvt.s32.f32 %v376
    %379 = vset.pattern.permute.xlu0 2
    %380 = vperm.xlu0 %379, %v374
    %v381 = vpop.permute.xlu0 %380
    %v383 = vperm.slane %v381, 0
    %v384 = vmul.f32 %v377, %v383
    %v385 = vadd.f32 %v331, %v384
    %s386 = sld [smem:[#allocation4 + $0x6]]
    %v387 = vstv %s386
    %v388 = vmul.f32 %v387, %v45
    %v389 = vmul.f32 %v383, %v46
    %v390 = vadd.f32 %v388, %v389
    %v391 = vadd.f32 %v390, %v47
    %v392 = vxor.u32 %v391, 2147483648
    %v393 = vmul.f32 %v392, 1.442695
    %v394 = vpow.pop %v393
    %v395 = vadd.f32 %v394, 1.0
    %v396 = vrcp.pop %v395
    %v397 = vmul.f32 %v395, %v396
    %v398 = vsub.f32 1.0, %v397
    %v399 = vmul.f32 %v396, %v398
    %v400 = vadd.f32 %v396, %v399
    %vm401 = vweird.f32 %v395
    %vm402 = vweird.f32 %v396
    %vm403 = vmor %vm401, %vm402
    %v404 = vsel %vm403, %v396, %v400
    %v405 = vand.u32 2147483647, %v395
    %vm406 = vcmp.eq.f32.partialorder %v405, 8.507059e+37
    %v407 = vand.u32 %v395, 2147483648
    %v408 = vor.u32 1.1754944e-38, %v407
    %v409 = vsel %vm406, %v408, %v404
    %v410 = vmul.f32 1.0, %v409
    %v411 = vtanh.pop %v391
    %v412 = vmul.f32 %v410, %v368
    %414 = vrot.lane.b32.xlu0 %v411, 125
    %v415 = vpop.permute.xlu0 %414
    %v417 = vmul.f32 %v410, %v415
    %419 = vrot.lane.b32.xlu0 %v417, 1
    %v420 = vpop.permute.xlu0 %419
    %v422 = vadd.f32 %v412, %v420
    %v423 = vtanh.pop %v422
    %425 = vrot.lane.b32.xlu0 %v423, 1
    %v426 = vpop.permute.xlu0 %425
    %v428 = vmul.f32 %v410, %v426
    %vm429 = vcmp.eq.s32.totalorder %v51, 6
    %v430 = vsel %vm429, 1, 0
    %v431 = vcvt.s32.f32 %v430
    %433 = vset.pattern.permute.xlu0 2
    %434 = vperm.xlu0 %433, %v428
    %v435 = vpop.permute.xlu0 %434
    %v437 = vperm.slane %v435, 0
    %v438 = vmul.f32 %v431, %v437
    %v439 = vadd.f32 %v385, %v438
    %s440 = sld [smem:[#allocation4 + $0x7]]
    %v441 = vstv %s440
    %v442 = vmul.f32 %v441, %v45
    %v443 = vmul.f32 %v437, %v46
    %v444 = vadd.f32 %v442, %v443
    %v445 = vadd.f32 %v444, %v47
    %v446 = vxor.u32 %v445, 2147483648
    %v447 = vmul.f32 %v446, 1.442695
    %v448 = vpow.pop %v447
    %v449 = vadd.f32 %v448, 1.0
    %v450 = vrcp.pop %v449
    %v451 = vmul.f32 %v449, %v450
    %v452 = vsub.f32 1.0, %v451
    %v453 = vmul.f32 %v450, %v452
    %v454 = vadd.f32 %v450, %v453
    %vm455 = vweird.f32 %v449
    %vm456 = vweird.f32 %v450
    %vm457 = vmor %vm455, %vm456
    %v458 = vsel %vm457, %v450, %v454
    %v459 = vand.u32 2147483647, %v449
    %vm460 = vcmp.eq.f32.partialorder %v459, 8.507059e+37
    %v461 = vand.u32 %v449, 2147483648
    %v462 = vor.u32 1.1754944e-38, %v461
    %v463 = vsel %vm460, %v462, %v458
    %v464 = vmul.f32 1.0, %v463
    %v465 = vtanh.pop %v445
    %v466 = vmul.f32 %v464, %v422
    %468 = vrot.lane.b32.xlu0 %v465, 125
    %v469 = vpop.permute.xlu0 %468
    %v471 = vmul.f32 %v464, %v469
    %473 = vrot.lane.b32.xlu0 %v471, 1
    %v474 = vpop.permute.xlu0 %473
    %v476 = vadd.f32 %v466, %v474
    %v477 = vtanh.pop %v476
    %479 = vrot.lane.b32.xlu0 %v477, 1
    %v480 = vpop.permute.xlu0 %479
    %v482 = vmul.f32 %v464, %v480
    %vm483 = vcmp.eq.s32.totalorder %v51, 7
    %v484 = vsel %vm483, 1, 0
    %v485 = vcvt.s32.f32 %v484
    %487 = vset.pattern.permute.xlu0 2
    %488 = vperm.xlu0 %487, %v482
    %v489 = vpop.permute.xlu0 %488
    %v491 = vperm.slane %v489, 0
    %v492 = vmul.f32 %v485, %v491
    %v493 = vadd.f32 %v439, %v492
    %vm494 = vcmask 57344
    %495 = vst.msk [vmem:[#allocation7] sm:$0x1] %vm494, %v493
    %v496 = vperm.slane %v482, 0
    %497 = vrot.lane.b32.xlu0 %v496, 126
    %v498 = vpop.permute.xlu0 %497
    %vm500 = vcmask 0
    %501 = vst.msk [vmem:[#allocation8] sm:$0x1] %vm500, %v498
    %v503 = vperm.slane %v476, 0
    %504 = vrot.lane.b32.xlu0 %v503, 127
    %v505 = vpop.permute.xlu0 %504
    %507 = vst.msk [vmem:[#allocation10] sm:$0x1] %vm500, %v505
    // Predicated region
    $region30: #{tpu_custom_call.1} parent=1 // pred_check
      _
    $region31: #{tpu_custom_call.1} parent=1 // pred_check_branch
      %509 = sbr.rel (0) target = $region33
    $region32: #{tpu_custom_call.1} parent=1 // pred_region
      %511 = vsyncadd [#allocation5], 0
      %s513 = sshll.u32 [#allocation7], 4
      %s514 = int_to_ptr.vmem [resolvable:$true] %s513
      %s515 = sshll.u32 %s6, 4
      %s516 = int_to_ptr.hbm [resolvable:$true] %s515
      %518 = dma.vmem_to_hbm [thread:$0]  %s514, 16, %s516, [#allocation5]
    $region33: #{tpu_custom_call.1} parent=1 // pred_fallthru
      _
    // Predicated region
    $region34: #{tpu_custom_call.1} parent=1 // pred_check
      _
    $region35: #{tpu_custom_call.1} parent=1 // pred_check_branch
      %520 = sbr.rel (0) target = $region37
    $region36: #{tpu_custom_call.1} parent=1 // pred_region
      %522 = vsyncadd [#allocation9], 0
      %s524 = sshll.u32 [#allocation8], 4
      %s525 = int_to_ptr.vmem [resolvable:$true] %s524
      %s526 = sshll.u32 %s7, 4
      %s527 = int_to_ptr.hbm [resolvable:$true] %s526
      %529 = dma.vmem_to_hbm [thread:$0]  %s525, 16, %s527, [#allocation9]
    $region37: #{tpu_custom_call.1} parent=1 // pred_fallthru
      _
    // Predicated region
    $region38: #{tpu_custom_call.1} parent=1 // pred_check
      _
    $region39: #{tpu_custom_call.1} parent=1 // pred_check_branch
      %531 = sbr.rel (0) target = $region41
    $region40: #{tpu_custom_call.1} parent=1 // pred_region
      %533 = vsyncadd [#allocation9], 0
      %s535 = sshll.u32 [#allocation10], 4
      %s536 = int_to_ptr.vmem [resolvable:$true] %s535
      %s537 = sshll.u32 %s8, 4
      %s538 = int_to_ptr.hbm [resolvable:$true] %s537
      %540 = dma.vmem_to_hbm [thread:$0]  %s536, 16, %s538, [#allocation9]
    $region41: #{tpu_custom_call.1} parent=1 // pred_fallthru
      _
    // Predicated region
    $region42: #{tpu_custom_call.1} parent=1 // pred_check
      _
    $region43: #{tpu_custom_call.1} parent=1 // pred_check_branch
      %542 = sbr.rel (0) target = $region45
    $region44: #{tpu_custom_call.1} parent=1 // pred_region
      %544 = dma.done [#allocation5], 16
    $region45: #{tpu_custom_call.1} parent=1 // pred_fallthru
      _
    // Predicated region
    $region46: #{tpu_custom_call.1} parent=1 // pred_check
      _
    $region47: #{tpu_custom_call.1} parent=1 // pred_check_branch
      %546 = sbr.rel (0) target = $region49
    $region48: #{tpu_custom_call.1} parent=1 // pred_region
      %548 = dma.done [#allocation9], 16
    $region49: #{tpu_custom_call.1} parent=1 // pred_fallthru
      _
    // Predicated region
    $region50: #{tpu_custom_call.1} parent=1 // pred_check
      _
    $region51: #{tpu_custom_call.1} parent=1 // pred_check_branch
      %550 = sbr.rel (0) target = $region53
    $region52: #{tpu_custom_call.1} parent=1 // pred_region
      %552 = dma.done [#allocation9], 16
    $region53: #{tpu_custom_call.1} parent=1 // pred_fallthru
      _
    %553 = vsyncpa [#allocation5], 1
    %554 = vsyncpa [#allocation9], 1
    %555 = vsyncpa [#allocation6], 1

</llo_original>
